<compile_context>
chip_gen: v7x
topology: tpu7x:2x2x1
jax: 0.10.0
libtpu: 0.0.40
codegen_flags: <defaults>
</compile_context>

<pallas_src>
import math

import jax
import jax.numpy as jnp
from jax.experimental import pallas as pl
from jax.experimental.pallas import tpu as pltpu


# ----------------------------- config (small, synthetic) -----------------------------
BATCH = 2
SEQ = 8
HIDDEN = 32          # config.hidden_size
INTERMEDIATE = 64    # config.intermediate_size

_GELU_C = math.sqrt(2.0 / math.pi)


# ------------------------------------ Pallas kernel ----------------------------------
def gemma_mlp_kernel(x_ref, wgu_ref, wd_ref, o_ref, acc_ref):
    # x_ref  : (tm, H)      bf16 input rows (resident across the I axis)
    # wgu_ref: (2, H, ti)   [gate; up] weight tiles, pre-transposed (in, out)
    # wd_ref : (ti, H)      down_proj weight tile, pre-transposed (in, out)
    # o_ref  : (tm, H)      output rows (written on the last I step)
    # acc_ref: (tm, H) f32  VMEM accumulator for the down projection
    k = pl.program_id(1)

    @pl.when(k == 0)
    def _init():
        acc_ref[...] = jnp.zeros_like(acc_ref)

    x = x_ref[...]
    # bf16 operands, f32 accumulation on the MXU.
    gate = jnp.dot(x, wgu_ref[0], preferred_element_type=jnp.float32)
    up = jnp.dot(x, wgu_ref[1], preferred_element_type=jnp.float32)

    # torch.nn.functional.gelu(gate, approximate='tanh'), all in f32
    # (tanh goes to the EUP slot; no bf16 VPU math -> v5e safe).
    g3 = gate * gate * gate
    gelu = 0.5 * gate * (1.0 + jnp.tanh(_GELU_C * (gate + 0.044715 * g3)))
    # Exactly one bf16 cast before the down matmul.
    h = (gelu * up).astype(wd_ref.dtype)

    acc_ref[...] += jnp.dot(h, wd_ref[...], preferred_element_type=jnp.float32)

    @pl.when(k == pl.num_programs(1) - 1)
    def _finalize():
        o_ref[...] = acc_ref[...].astype(o_ref.dtype)


# ------------------------------------- tile choice -----------------------------------
def _choose_tiles(M, I):
    """Pick (tm, ti) row / intermediate tiles.

    tm: 256-aligned (fills the 2x256x256 MXU on v6e/v7x, >=2 tiles lets the
        "parallel" M axis shard across v7x's dual TensorCores); full block at
        small M.
    ti: 512 keeps bf16 weight tiles + f32 accumulator under the 32 MiB default
        scoped VMEM (safe on v7x's 64 MiB physical); full block at small I.
        v5e/v6e (128 MiB VMEM) could take larger ti, but 512-wide tiles are
        already ~85% of HBM roofline.
    """
    tm = M if M <= 256 else 256
    if I <= 1024:
        ti = I
    else:
        ti = I
        for cand in (512, 256, 128):
            if I % cand == 0:
                ti = cand
                break
    return tm, ti


# ------------------------------------ host wrapper ------------------------------------
def gemma_mlp(x, wgu_t, wd_t):
    """Fused GemmaMLP forward.

    x     : (B, S, H)   activations (bf16 recommended)
    wgu_t : (2, H, I)   stack of [gate_proj.weight.T, up_proj.weight.T] (bf16)
    wd_t  : (I, H)      down_proj.weight.T (bf16)
    returns (B, S, H) in x.dtype
    """
    B, S, H = x.shape
    two, Hw, I = wgu_t.shape
    assert two == 2 and Hw == H and wd_t.shape == (I, H)

    M = B * S
    x2d = x.reshape(M, H)

    tm, ti = _choose_tiles(M, I)

    m_tiles = pl.cdiv(M, tm)
    Mp = m_tiles * tm
    if Mp != M:
        # Zero-pad ragged M instead of collapsing to one giant block.
        x2d = jnp.pad(x2d, ((0, Mp - M), (0, 0)))
    i_tiles = I // ti
    grid = (m_tiles, i_tiles)

    in_itemsize = jnp.dtype(x.dtype).itemsize
    w_itemsize = jnp.dtype(wgu_t.dtype).itemsize

    # Advisory cost estimate for XLA scheduling.
    flops = 6 * M * H * I  # gate + up + down matmuls
    bytes_accessed = (
        Mp * H * in_itemsize * 2                                   # x in + y out
        + m_tiles * (2 * H * I + I * H) * w_itemsize               # weights re-streamed per M tile
    )
    cost = pl.CostEstimate(flops=flops, transcendentals=M * I,
                           bytes_accessed=bytes_accessed)

    # VMEM budget: double-buffered tiles + f32 accumulator + f32 intermediates.
    vmem_est = (
        2 * (tm * H * in_itemsize)        # x tiles
        + 2 * (2 * H * ti * w_itemsize)   # gate/up weight tiles
        + 2 * (ti * H * w_itemsize)       # down weight tiles
        + 2 * (tm * H * in_itemsize)      # output tiles
        + tm * H * 4                      # f32 accumulator
        + 4 * (tm * ti * 4)               # in-flight f32 gate/up/gelu/h
    )
    # Cap at 64 MiB: safe on every generation (v7x physical VMEM is 64 MiB).
    vmem_limit = int(min(max(2 * vmem_est, 32 * 1024 * 1024), 64 * 1024 * 1024))

    out2d = pl.pallas_call(
        gemma_mlp_kernel,
        out_shape=jax.ShapeDtypeStruct((Mp, H), x.dtype),
        grid=grid,
        in_specs=[
            pl.BlockSpec((tm, H), lambda i, k: (i, 0)),         # x rows
            pl.BlockSpec((2, H, ti), lambda i, k: (0, 0, k)),   # gate|up tile
            pl.BlockSpec((ti, H), lambda i, k: (k, 0)),         # down tile
        ],
        out_specs=pl.BlockSpec((tm, H), lambda i, k: (i, 0)),
        scratch_shapes=[pltpu.VMEM((tm, H), jnp.float32)],
        compiler_params=pltpu.CompilerParams(
            dimension_semantics=("parallel", "arbitrary"),
            vmem_limit_bytes=vmem_limit,
        ),
        cost_estimate=cost,
    )(x2d, wgu_t, wd_t)

    if Mp != M:
        out2d = out2d[:M]
    return out2d.reshape(B, S, H)


# ------------------------------------ pure-JAX reference ------------------------------
def reference_mlp(x, wg_t, wu_t, wd_t):
    """f32 reference with pre-transposed (in, out) weights."""
    B, S, H = x.shape
    x2d = x.reshape(B * S, H)
    gate = x2d @ wg_t
    up = x2d @ wu_t
    g = jax.nn.gelu(gate, approximate=True)  # tanh approximation
    return ((g * up) @ wd_t).reshape(B, S, H)


# ------------------------------------------ main --------------------------------------
if __name__ == "__main__":
    key = jax.random.PRNGKey(0)
    k_x, k_g, k_u, k_d = jax.random.split(key, 4)

    x = jax.random.normal(k_x, (BATCH, SEQ, HIDDEN), dtype=jnp.float32)

    # nn.Linear weight layout: (out_features, in_features)
    scale = 0.05
    wg = scale * jax.random.normal(k_g, (INTERMEDIATE, HIDDEN), jnp.float32)
    wu = scale * jax.random.normal(k_u, (INTERMEDIATE, HIDDEN), jnp.float32)
    wd = scale * jax.random.normal(k_d, (HIDDEN, INTERMEDIATE), jnp.float32)

    # Init-time weight prep (done once, not per forward): pre-transpose to
    # (in, out), stack gate/up, cast to bf16 for the MXU.
    wgu_t = jnp.stack([wg.T, wu.T]).astype(jnp.bfloat16)   # (2, H, I)
    wd_t = jnp.asarray(wd.T).astype(jnp.bfloat16)          # (I, H)
    x_bf16 = x.astype(jnp.bfloat16)

    out = gemma_mlp(x_bf16, wgu_t, wd_t)
    out = jax.block_until_ready(out)

    # f32 reference using the same (bf16-quantized) weights/activations; the
    # remaining delta is only the bf16 MXU operand rounding, so a loose
    # tolerance is appropriate (exact f32 parity is no longer the target).
    ref = reference_mlp(
        x_bf16.astype(jnp.float32),
        wgu_t[0].astype(jnp.float32),
        wgu_t[1].astype(jnp.float32),
        wd_t.astype(jnp.float32),
    )

    assert out.shape == ref.shape, "shape mismatch"
    max_err = float(jnp.max(jnp.abs(out.astype(jnp.float32) - ref)))
    assert max_err < 2e-2, f"GemmaMLP output mismatch (max abs err {max_err})"

    print("KERNEL_OK")
</pallas_src>

<mosaic_0001>
module attributes {stable_mosaic.version = 11 : i64} {
  func.func @gemma_mlp_kernel(%arg0: i32, %arg1: i32, %arg2: memref<16x32xbf16, #tpu.memory_space<vmem>>, %arg3: memref<2x32x64xbf16, #tpu.memory_space<vmem>>, %arg4: memref<64x32xbf16, #tpu.memory_space<vmem>>, %arg5: memref<16x32xbf16, #tpu.memory_space<vmem>>, %arg6: memref<16x32xf32, #tpu.memory_space<vmem>>) attributes {dimension_semantics = [#tpu.dimension_semantics<parallel>, #tpu.dimension_semantics<arbitrary>], iteration_bounds = array<i64: 1, 1>, scalar_prefetch = 0 : i64, scratch_operands = 1 : i64, tpu.core_type = #tpu.core_type<tc>, window_params = [{transform_indices = @transform_0, window_bounds = array<i64: 16, 32>}, {transform_indices = @transform_1, window_bounds = array<i64: 2, 32, 64>}, {transform_indices = @transform_2, window_bounds = array<i64: 64, 32>}, {transform_indices = @transform_3, window_bounds = array<i64: 16, 32>}]} {
    %c0_i32 = arith.constant 0 : i32
    %0 = arith.cmpi eq, %arg1, %c0_i32 : i32
    %1 = arith.extui %0 : i1 to i32
    %c0_i32_0 = arith.constant 0 : i32
    %2 = arith.cmpi ne, %1, %c0_i32_0 : i32
    scf.if %2 {
      %cst_21 = arith.constant 0.000000e+00 : f32
      %33 = vector.broadcast %cst_21 : f32 to vector<16x32xf32>
      %c0_22 = arith.constant 0 : index
      %c0_23 = arith.constant 0 : index
      %34 = vector.load %arg6[%c0_22, %c0_23] : memref<16x32xf32, #tpu.memory_space<vmem>>, vector<16x32xf32>
      tpu.vector_store %arg6[%c0_22, %c0_23], %33 {strides = array<i32>} : memref<16x32xf32, #tpu.memory_space<vmem>>, vector<16x32xf32>,
    } else {
    }
    %c0 = arith.constant 0 : index
    %c0_1 = arith.constant 0 : index
    %3 = vector.load %arg2[%c0, %c0_1] : memref<16x32xbf16, #tpu.memory_space<vmem>>, vector<16x32xbf16>
    %c0_2 = arith.constant 0 : index
    %c0_3 = arith.constant 0 : index
    %c0_4 = arith.constant 0 : index
    %4 = vector.load %arg3[%c0_2, %c0_3, %c0_4] : memref<2x32x64xbf16, #tpu.memory_space<vmem>>, vector<1x32x64xbf16>
    %5 = vector.shape_cast %4 : vector<1x32x64xbf16> to vector<32x64xbf16>
    %cst = arith.constant dense<0.000000e+00> : vector<16x64xf32>
    %6 = tpu.matmul %3, %5, %cst {dimension_numbers = #tpu.dot_dimension_numbers<[1], [0], [0], [1], [0, 0, 1, 1], [], []>} : vector<16x32xbf16>, vector<32x64xbf16>, vector<16x64xf32> -> vector<16x64xf32>
    %c1 = arith.constant 1 : index
    %c0_5 = arith.constant 0 : index
    %c0_6 = arith.constant 0 : index
    %7 = vector.load %arg3[%c1, %c0_5, %c0_6] : memref<2x32x64xbf16, #tpu.memory_space<vmem>>, vector<1x32x64xbf16>
    %8 = vector.shape_cast %7 : vector<1x32x64xbf16> to vector<32x64xbf16>
    %cst_7 = arith.constant dense<0.000000e+00> : vector<16x64xf32>
    %9 = tpu.matmul %3, %8, %cst_7 {dimension_numbers = #tpu.dot_dimension_numbers<[1], [0], [0], [1], [0, 0, 1, 1], [], []>} : vector<16x32xbf16>, vector<32x64xbf16>, vector<16x64xf32> -> vector<16x64xf32>
    %10 = arith.mulf %6, %6 : vector<16x64xf32>
    %11 = arith.mulf %10, %6 : vector<16x64xf32>
    %cst_8 = arith.constant 5.000000e-01 : f32
    %12 = vector.broadcast %cst_8 : f32 to vector<16x64xf32>
    %13 = arith.mulf %12, %6 : vector<16x64xf32>
    %cst_9 = arith.constant 4.471500e-02 : f32
    %14 = vector.broadcast %cst_9 : f32 to vector<16x64xf32>
    %15 = arith.mulf %14, %11 : vector<16x64xf32>
    %16 = arith.addf %6, %15 : vector<16x64xf32>
    %cst_10 = arith.constant 0.797884583 : f32
    %17 = vector.broadcast %cst_10 : f32 to vector<16x64xf32>
    %18 = arith.mulf %17, %16 : vector<16x64xf32>
    %19 = math.tanh %18 : vector<16x64xf32>
    %cst_11 = arith.constant 1.000000e+00 : f32
    %20 = vector.broadcast %cst_11 : f32 to vector<16x64xf32>
    %21 = arith.addf %20, %19 : vector<16x64xf32>
    %22 = arith.mulf %13, %21 : vector<16x64xf32>
    %23 = arith.mulf %22, %9 : vector<16x64xf32>
    %24 = arith.truncf %23 : vector<16x64xf32> to vector<16x64xbf16>
    %c0_12 = arith.constant 0 : index
    %c0_13 = arith.constant 0 : index
    %25 = vector.load %arg6[%c0_12, %c0_13] : memref<16x32xf32, #tpu.memory_space<vmem>>, vector<16x32xf32>
    %c0_14 = arith.constant 0 : index
    %c0_15 = arith.constant 0 : index
    %26 = vector.load %arg4[%c0_14, %c0_15] : memref<64x32xbf16, #tpu.memory_space<vmem>>, vector<64x32xbf16>
    %cst_16 = arith.constant dense<0.000000e+00> : vector<16x32xf32>
    %27 = tpu.matmul %24, %26, %cst_16 {dimension_numbers = #tpu.dot_dimension_numbers<[1], [0], [0], [1], [0, 0, 1, 1], [], []>} : vector<16x64xbf16>, vector<64x32xbf16>, vector<16x32xf32> -> vector<16x32xf32>
    %28 = arith.addf %25, %27 : vector<16x32xf32>
    %c0_17 = arith.constant 0 : index
    %c0_18 = arith.constant 0 : index
    %29 = vector.load %arg6[%c0_17, %c0_18] : memref<16x32xf32, #tpu.memory_space<vmem>>, vector<16x32xf32>
    tpu.vector_store %arg6[%c0_17, %c0_18], %28 {strides = array<i32>} : memref<16x32xf32, #tpu.memory_space<vmem>>, vector<16x32xf32>,
    %c0_i32_19 = arith.constant 0 : i32
    %30 = arith.cmpi eq, %arg1, %c0_i32_19 : i32
    %31 = arith.extui %30 : i1 to i32
    %c0_i32_20 = arith.constant 0 : i32
    %32 = arith.cmpi ne, %31, %c0_i32_20 : i32
    scf.if %32 {
      %c0_21 = arith.constant 0 : index
      %c0_22 = arith.constant 0 : index
      %33 = vector.load %arg6[%c0_21, %c0_22] : memref<16x32xf32, #tpu.memory_space<vmem>>, vector<16x32xf32>
      %34 = arith.truncf %33 : vector<16x32xf32> to vector<16x32xbf16>
      %c0_23 = arith.constant 0 : index
      %c0_24 = arith.constant 0 : index
      %35 = vector.load %arg5[%c0_23, %c0_24] : memref<16x32xbf16, #tpu.memory_space<vmem>>, vector<16x32xbf16>
      tpu.vector_store %arg5[%c0_23, %c0_24], %34 {strides = array<i32>} : memref<16x32xbf16, #tpu.memory_space<vmem>>, vector<16x32xbf16>,
    } else {
    }
    return
  }
  func.func @transform_0(%arg0: i32, %arg1: i32) -> (i32, i32) {
    %c0_i32 = arith.constant 0 : i32
    %c0_i32_0 = arith.constant 0 : i32
    return %arg0, %c0_i32 : i32, i32
  }
  func.func @transform_1(%arg0: i32, %arg1: i32) -> (i32, i32, i32) {
    %c0_i32 = arith.constant 0 : i32
    %c0_i32_0 = arith.constant 0 : i32
    %c0_i32_1 = arith.constant 0 : i32
    return %c0_i32, %c0_i32_0, %arg1 : i32, i32, i32
  }
  func.func @transform_2(%arg0: i32, %arg1: i32) -> (i32, i32) {
    %c0_i32 = arith.constant 0 : i32
    %c0_i32_0 = arith.constant 0 : i32
    return %arg1, %c0_i32 : i32, i32
  }
  func.func @transform_3(%arg0: i32, %arg1: i32) -> (i32, i32) {
    %c0_i32 = arith.constant 0 : i32
    %c0_i32_0 = arith.constant 0 : i32
    return %arg0, %c0_i32 : i32, i32
  }
}

</mosaic_0001>

<llo_original>
// kernel: tpu_custom_call.1
$region0: #{tpu_custom_call.1}
  #allocation0 [shape = 'u32[]', space=smem, size = 0x4, offset = 0x4, fixed_abs, tag = 'smem constant byte address 0x4 - core index']
  #allocation1 [shape = 'u32[144,128]{1,0:T(1,128)}', space=vmem, size = 0x12000, scoped, tag = 'internal scratch']
  #allocation2 [shape = 'f32[16,32]{1,0:T(8,128)}', space=vmem, size = 0x2000, scoped, tag = 'scratch operand']
  %s0 = inlined_call_operand.vmem [shape: bf16[16,32], index: 0, kind: input, shape index: {}]
  %s1 = inlined_call_operand.vmem [shape: bf16[2,32,64], index: 1, kind: input, shape index: {}]
  %s2 = inlined_call_operand.vmem [shape: bf16[64,32], index: 2, kind: input, shape index: {}]
  %s3 = inlined_call_operand.hbm [shape: bf16[16,32], index: 3, kind: output, shape index: {}]
  %s4 = sld [smem:[#allocation0]]
  $region30: #{tpu_custom_call.1} parent=0
    _
  %s6 = ssub.s32 1, %s4
  %s7 = scalar_select 0, %s6, %s4
  $region1: #{tpu_custom_call.1} parent=0
    #allocation3 [shape = 'u8[4096]{0}', space=vmem, size = 0x1000, scoped, tag = 'output window, operand 0, single buffered']
    #allocation4 [shape = 's32[1]{0}', space=sflag, size = 0x4, scoped, tag = 'scoped memory for tpu_custom_call.1']
    %8 = vsyncpa [#allocation4], 0
    // Predicated region
    $region2: #{tpu_custom_call.1} parent=1 // pred_check
      _
    $region3: #{tpu_custom_call.1} parent=1 // pred_check_branch
      %10 = sbr.rel (0) target = $region5
    $region4: #{tpu_custom_call.1} parent=1 // pred_region
      _
    $region5: #{tpu_custom_call.1} parent=1 // pred_fallthru
      _
    // Predicated region
    $region6: #{tpu_custom_call.1} parent=1 // pred_check
      _
    $region7: #{tpu_custom_call.1} parent=1 // pred_check_branch
      %12 = sbr.rel (0) target = $region9
    $region8: #{tpu_custom_call.1} parent=1 // pred_region
      _
    $region9: #{tpu_custom_call.1} parent=1 // pred_fallthru
      _
    // Predicated region
    $region10: #{tpu_custom_call.1} parent=1 // pred_check
      _
    $region11: #{tpu_custom_call.1} parent=1 // pred_check_branch
      %14 = sbr.rel (0) target = $region13
    $region12: #{tpu_custom_call.1} parent=1 // pred_region
      _
    $region13: #{tpu_custom_call.1} parent=1 // pred_fallthru
      _
    %p16 = scmp.eq.s32.totalorder 0, 0
    // Predicated region
    $region14: #{tpu_custom_call.1} parent=1 // pred_check
      %p17 = pneg %p16
    $region15: #{tpu_custom_call.1} parent=1 // pred_check_branch
      %19 = sbr.rel (%p17) target = $region17
    $region16: #{tpu_custom_call.1} parent=1 // pred_region
      %vm20 = vcmask 261120
      %21 = vst.msk [vmem:[#allocation2] sm:$0xff] %vm20, 0.0
      %22 = vst.msk [vmem:[#allocation2 + $0x8] sm:$0xff] %vm20, 0.0
    $region17: #{tpu_custom_call.1} parent=1 // pred_fallthru
      _
    %v23 = vld [vmem:[%s0] sm:$0xf]
    %v24 = vld [vmem:[%s0 + $0x4] sm:$0xf]
    %v25 = vld [vmem:[%s1] sm:$0xf]
    %v26 = vld [vmem:[%s1 + $0x4] sm:$0xf]
    %v27 = vld [vmem:[%s1 + $0x8] sm:$0xf]
    %v28 = vld [vmem:[%s1 + $0xc] sm:$0xf]
    %v31 = vunpack.c.l.b16 %v23
    %v32 = vunpack.c.l.b16 %v24
    %v33 = vpack.c.b16 %v32, %v31
    %v38 = vunpack.c.l.b16 %v25
    %v39 = vunpack.c.l.b16 %v26
    %v40 = vunpack.c.l.b16 %v27
    %v41 = vunpack.c.l.b16 %v28
    %v42 = vpack.c.b16 %v39, %v38
    %v43 = vpack.c.b16 %v41, %v40
    %vm46 = vcmask 261120
    %v48 = vsel %vm46, %v33, 0
    %50 = vmatprep.subr.bf16.mxu0 0
    %51 = vmatpush1.bf16.msra.mxu0 %v42
    %52 = vmatprep.subr.bf16.mxu0 0
    %53 = vmatpush1.bf16.msra.mxu0 %v43
    %54 = vmatprep.subr.bf16.mxu0 0
    %55 = vmatpush1.bf16.msra.mxu0 0
    %56 = vmatprep.subr.bf16.mxu0 0
    %57 = vmatpush1.bf16.msra.mxu0 0
    %58 = vmatprep.subr.bf16.mxu0 0
    %59 = vmatpush1.bf16.msra.mxu0 0
    %60 = vmatprep.subr.bf16.mxu0 0
    %61 = vmatpush1.bf16.msra.mxu0 0
    %62 = vmatprep.subr.bf16.mxu0 0
    %63 = vmatpush1.bf16.msra.mxu0 0
    %64 = vmatprep.subr.bf16.mxu0 0
    %65 = vmatpush1.bf16.msra.mxu0 0
    %66 = vmatprep.subr.bf16.mxu0 0
    %67 = vmatpush1.bf16.msra.mxu0 0
    %68 = vmatprep.subr.bf16.mxu0 0
    %69 = vmatpush1.bf16.msra.mxu0 0
    %70 = vmatprep.subr.bf16.mxu0 0
    %71 = vmatpush1.bf16.msra.mxu0 0
    %72 = vmatprep.subr.bf16.mxu0 0
    %73 = vmatpush1.bf16.msra.mxu0 0
    %74 = vmatprep.subr.bf16.mxu0 0
    %75 = vmatpush1.bf16.msra.mxu0 0
    %76 = vmatprep.subr.bf16.mxu0 0
    %77 = vmatpush1.bf16.msra.mxu0 0
    %78 = vmatprep.subr.bf16.mxu0 0
    %79 = vmatpush1.bf16.msra.mxu0 0
    %80 = vmatprep.subr.bf16.mxu0 0
    %81 = vmatpush1.bf16.msra.mxu0 0
    %82 = vmatprep.mubr.bf16.mxu0 0
    %83 = vmatmul.mubr.bf16.gmra.mrb[0].mxu0 %v48
    %v84 = vpop.f32.mrb[0].mxu0
    %v85 = vadd.f32 0.0, %v84
    %v86 = vpop.f32.mrb[0].mxu0
    %v87 = vpop.f32.mrb[0].mxu0
    %v88 = vadd.f32 0.0, %v87
    %v89 = vpop.f32.mrb[0].mxu0
    %90 = vdwg.mxu0
    %s91 = scalar_lea.vmem %s1, 16
    %v92 = vld [vmem:[%s91] sm:$0xf]
    %v93 = vld [vmem:[%s91 + $0x4] sm:$0xf]
    %v94 = vld [vmem:[%s91 + $0x8] sm:$0xf]
    %v95 = vld [vmem:[%s91 + $0xc] sm:$0xf]
    %v100 = vunpack.c.l.b16 %v92
    %v101 = vunpack.c.l.b16 %v93
    %v102 = vunpack.c.l.b16 %v94
    %v103 = vunpack.c.l.b16 %v95
    %v104 = vpack.c.b16 %v101, %v100
    %v105 = vpack.c.b16 %v103, %v102
    %108 = vmatprep.subr.bf16.mxu0 0
    %109 = vmatpush1.bf16.msra.mxu0 %v104
    %110 = vmatprep.subr.bf16.mxu0 0
    %111 = vmatpush1.bf16.msra.mxu0 %v105
    %112 = vmatprep.subr.bf16.mxu0 0
    %113 = vmatpush1.bf16.msra.mxu0 0
    %114 = vmatprep.subr.bf16.mxu0 0
    %115 = vmatpush1.bf16.msra.mxu0 0
    %116 = vmatprep.subr.bf16.mxu0 0
    %117 = vmatpush1.bf16.msra.mxu0 0
    %118 = vmatprep.subr.bf16.mxu0 0
    %119 = vmatpush1.bf16.msra.mxu0 0
    %120 = vmatprep.subr.bf16.mxu0 0
    %121 = vmatpush1.bf16.msra.mxu0 0
    %122 = vmatprep.subr.bf16.mxu0 0
    %123 = vmatpush1.bf16.msra.mxu0 0
    %124 = vmatprep.subr.bf16.mxu0 0
    %125 = vmatpush1.bf16.msra.mxu0 0
    %126 = vmatprep.subr.bf16.mxu0 0
    %127 = vmatpush1.bf16.msra.mxu0 0
    %128 = vmatprep.subr.bf16.mxu0 0
    %129 = vmatpush1.bf16.msra.mxu0 0
    %130 = vmatprep.subr.bf16.mxu0 0
    %131 = vmatpush1.bf16.msra.mxu0 0
    %132 = vmatprep.subr.bf16.mxu0 0
    %133 = vmatpush1.bf16.msra.mxu0 0
    %134 = vmatprep.subr.bf16.mxu0 0
    %135 = vmatpush1.bf16.msra.mxu0 0
    %136 = vmatprep.subr.bf16.mxu0 0
    %137 = vmatpush1.bf16.msra.mxu0 0
    %138 = vmatprep.subr.bf16.mxu0 0
    %139 = vmatpush1.bf16.msra.mxu0 0
    %140 = vmatprep.mubr.bf16.mxu0 0
    %141 = vmatmul.mubr.bf16.gmra.mrb[0].mxu0 %v48
    %v142 = vpop.f32.mrb[0].mxu0
    %v143 = vadd.f32 0.0, %v142
    %v144 = vpop.f32.mrb[0].mxu0
    %v145 = vpop.f32.mrb[0].mxu0
    %v146 = vadd.f32 0.0, %v145
    %v147 = vpop.f32.mrb[0].mxu0
    %148 = vdwg.mxu0
    %v149 = vmul.f32 %v85, %v85
    %v150 = vmul.f32 %v88, %v88
    %v151 = vmul.f32 %v149, %v85
    %v152 = vmul.f32 %v150, %v88
    %v153 = vmul.f32 %v85, 0.5
    %v154 = vmul.f32 %v88, 0.5
    %v155 = vmul.f32 %v151, 0.044715
    %v156 = vmul.f32 %v152, 0.044715
    %v157 = vadd.f32 %v85, %v155
    %v158 = vadd.f32 %v88, %v156
    %v159 = vmul.f32 %v157, 0.7978846
    %v160 = vmul.f32 %v158, 0.7978846
    %v161 = vtanh.pop %v159
    %v162 = vtanh.pop %v160
    %v163 = vadd.f32 %v161, 1.0
    %v164 = vadd.f32 %v162, 1.0
    %v165 = vmul.f32 %v153, %v163
    %v166 = vmul.f32 %v154, %v164
    %v167 = vmul.f32 %v165, %v143
    %v168 = vmul.f32 %v166, %v146
    %v169 = vpack.c.bf16 %v168, %v167
    %v170 = vld [vmem:[#allocation2] sm:$0xff]
    %v171 = vld [vmem:[#allocation2 + $0x8] sm:$0xff]
    %v172 = vld [vmem:[%s2] sm:$0xf]
    %v173 = vld [vmem:[%s2 + $0x4] sm:$0xf]
    %v174 = vld [vmem:[%s2 + $0x8] sm:$0xf]
    %v175 = vld [vmem:[%s2 + $0xc] sm:$0xf]
    %v176 = vld [vmem:[%s2 + $0x10] sm:$0xf]
    %v177 = vld [vmem:[%s2 + $0x14] sm:$0xf]
    %v178 = vld [vmem:[%s2 + $0x18] sm:$0xf]
    %v179 = vld [vmem:[%s2 + $0x1c] sm:$0xf]
    %v188 = vunpack.c.l.b16 %v172
    %v189 = vunpack.c.l.b16 %v173
    %v190 = vunpack.c.l.b16 %v174
    %v191 = vunpack.c.l.b16 %v175
    %v192 = vunpack.c.l.b16 %v176
    %v193 = vunpack.c.l.b16 %v177
    %v194 = vunpack.c.l.b16 %v178
    %v195 = vunpack.c.l.b16 %v179
    %v196 = vpack.c.b16 %v189, %v188
    %v197 = vpack.c.b16 %v191, %v190
    %v198 = vpack.c.b16 %v193, %v192
    %v199 = vpack.c.b16 %v195, %v194
    %vm204 = vcmask 523264
    %v206 = vsel %vm204, %v169, 0
    %208 = vmatprep.subr.bf16.mxu0 0
    %209 = vmatpush1.bf16.msra.mxu0 %v196
    %210 = vmatprep.subr.bf16.mxu0 0
    %211 = vmatpush1.bf16.msra.mxu0 %v197
    %212 = vmatprep.subr.bf16.mxu0 0
    %213 = vmatpush1.bf16.msra.mxu0 %v198
    %214 = vmatprep.subr.bf16.mxu0 0
    %215 = vmatpush1.bf16.msra.mxu0 %v199
    %216 = vmatprep.subr.bf16.mxu0 0
    %217 = vmatpush1.bf16.msra.mxu0 0
    %218 = vmatprep.subr.bf16.mxu0 0
    %219 = vmatpush1.bf16.msra.mxu0 0
    %220 = vmatprep.subr.bf16.mxu0 0
    %221 = vmatpush1.bf16.msra.mxu0 0
    %222 = vmatprep.subr.bf16.mxu0 0
    %223 = vmatpush1.bf16.msra.mxu0 0
    %224 = vmatprep.subr.bf16.mxu0 0
    %225 = vmatpush1.bf16.msra.mxu0 0
    %226 = vmatprep.subr.bf16.mxu0 0
    %227 = vmatpush1.bf16.msra.mxu0 0
    %228 = vmatprep.subr.bf16.mxu0 0
    %229 = vmatpush1.bf16.msra.mxu0 0
    %230 = vmatprep.subr.bf16.mxu0 0
    %231 = vmatpush1.bf16.msra.mxu0 0
    %232 = vmatprep.subr.bf16.mxu0 0
    %233 = vmatpush1.bf16.msra.mxu0 0
    %234 = vmatprep.subr.bf16.mxu0 0
    %235 = vmatpush1.bf16.msra.mxu0 0
    %236 = vmatprep.subr.bf16.mxu0 0
    %237 = vmatpush1.bf16.msra.mxu0 0
    %238 = vmatprep.subr.bf16.mxu0 0
    %239 = vmatpush1.bf16.msra.mxu0 0
    %240 = vmatprep.mubr.bf16.mxu0 0
    %241 = vmatmul.mubr.bf16.gmra.mrb[0].mxu0 %v206
    %v242 = vpop.f32.mrb[0].mxu0
    %v243 = vadd.f32 0.0, %v242
    %v244 = vpop.f32.mrb[0].mxu0
    %v245 = vpop.f32.mrb[0].mxu0
    %v246 = vadd.f32 0.0, %v245
    %v247 = vpop.f32.mrb[0].mxu0
    %248 = vdwg.mxu0
    %v249 = vadd.f32 %v170, %v243
    %v250 = vadd.f32 %v171, %v246
    %251 = vst.msk [vmem:[#allocation2] sm:$0xff] %vm46, %v249
    %252 = vst.msk [vmem:[#allocation2 + $0x8] sm:$0xff] %vm46, %v250
    // Predicated region
    $region18: #{tpu_custom_call.1} parent=1 // pred_check
      %p253 = pneg %p16
    $region19: #{tpu_custom_call.1} parent=1 // pred_check_branch
      %255 = sbr.rel (%p253) target = $region21
    $region20: #{tpu_custom_call.1} parent=1 // pred_region
      %v256 = vld [vmem:[#allocation2] sm:$0xff]
      %v257 = vld [vmem:[#allocation2 + $0x8] sm:$0xff]
      %v258 = vpack.c.bf16 %v257, %v256
      %v260 = vunpack.c.l.b16 %v258
      %v261 = vunpack.c.h.b16 %v258
      %v262 = vpack.c.b16 %v260, %v260
      %v263 = vpack.c.b16 %v261, %v261
      %vm266 = vcmask 257024
      %267 = vst.msk [vmem:[#allocation3] sm:$0xf] %vm266, %v262
      %268 = vst.msk [vmem:[#allocation3 + $0x4] sm:$0xf] %vm266, %v263
    $region21: #{tpu_custom_call.1} parent=1 // pred_fallthru
      _
    // Predicated region
    $region22: #{tpu_custom_call.1} parent=1 // pred_check
      _
    $region23: #{tpu_custom_call.1} parent=1 // pred_check_branch
      %270 = sbr.rel (0) target = $region25
    $region24: #{tpu_custom_call.1} parent=1 // pred_region
      %s272 = ssub.s32 128, 128
      %273 = vsyncadd [#allocation4], %s272
      %s274 = sshll.u32 [#allocation3], 4
      %s275 = int_to_ptr.vmem [resolvable:$true] %s274
      %280 = dma.vmem_to_hbm [thread:$0]  %s275, 128, %s3, [#allocation4], 64, 64, 4
    $region25: #{tpu_custom_call.1} parent=1 // pred_fallthru
      _
    // Predicated region
    $region26: #{tpu_custom_call.1} parent=1 // pred_check
      _
    $region27: #{tpu_custom_call.1} parent=1 // pred_check_branch
      %282 = sbr.rel (0) target = $region29
    $region28: #{tpu_custom_call.1} parent=1 // pred_region
      %283 = dma.done [#allocation4], 128
    $region29: #{tpu_custom_call.1} parent=1 // pred_fallthru
      _
    %284 = vsyncpa [#allocation4], 1

</llo_original>
